<compile_context>
chip_gen: v7x
topology: tpu7x:2x2x1
jax: 0.10.0
libtpu: 0.0.40
codegen_flags: <defaults>
</compile_context>

<pallas_src>
import functools

import jax
import jax.numpy as jnp
from jax.experimental import pallas as pl
from jax.experimental.pallas import tpu as pltpu


_NEG = -1.0e30   # plain Python float (NOT a jnp array -> no captured constant)


def _silu(x):
    # SiLU(x) = x * sigmoid(x); sigmoid via tanh so the transcendental goes to
    # the (otherwise idle) EUP slot instead of exp + VPU divide.
    return x * (0.5 * jnp.tanh(0.5 * x) + 0.5)


def _sppf_kernel(x_ref, w1_ref, b1_ref, w2_ref, b2_ref, o_ref, *, H, W):
    L = H * W                                    # flattened spatial extent (lane axis)
    x = x_ref[...]                               # (nb*c1, L) f32, lane-dense

    # cv1: block-diagonal 1x1 conv (BN scale already folded into w1) + bias + SiLU.
    # NOTE: at these toy sizes the MXU is <0.1% utilized; for production channel
    # counts cast operands to bf16 (preferred_element_type=f32) instead.
    a = jnp.dot(w1_ref[...], x, preferred_element_type=jnp.float32) + b1_ref[...]
    a = _silu(a)                                 # (nb*c_, L)

    C = a.shape[0]

    # ---- constants hoisted once and reused by all three pools (JAX does not
    # CSE broadcast_in_dim; build pads / masks / iota exactly once). ----
    col = jax.lax.broadcasted_iota(jnp.int32, (C, L), 1) % W
    neg = jnp.full((C, L), _NEG, jnp.float32)
    col_masks = (col >= 1, col >= 2, col < W - 1, col < W - 2)
    pads = {d: jnp.full((C, d), _NEG, jnp.float32) for d in (1, 2, W, 2 * W)}

    def shift_lo(t, d):       # out[:, i] = t[:, i-d]; first d lanes -> -inf
        return jnp.concatenate([pads[d], t[:, :L - d]], axis=1)

    def shift_hi(t, d):       # out[:, i] = t[:, i+d]; last d lanes -> -inf
        return jnp.concatenate([t[:, d:], pads[d]], axis=1)

    def pool5(t):
        """5x5 max pool, stride 1, pad 2 (PyTorch -inf padding semantics),
        separable: max over the W (column) window then the H (row) window.
        Column shifts are masked with the precomputed col masks so they never
        leak across a row boundary; row shifts move by whole multiples of W and
        the -inf pad handles the top/bottom image edges."""
        m = t
        m = jnp.maximum(m, jnp.where(col_masks[0], shift_lo(t, 1), neg))
        m = jnp.maximum(m, jnp.where(col_masks[1], shift_lo(t, 2), neg))
        m = jnp.maximum(m, jnp.where(col_masks[2], shift_hi(t, 1), neg))
        m = jnp.maximum(m, jnp.where(col_masks[3], shift_hi(t, 2), neg))
        r = m
        r = jnp.maximum(r, shift_lo(m, W))
        r = jnp.maximum(r, shift_lo(m, 2 * W))
        r = jnp.maximum(r, shift_hi(m, W))
        r = jnp.maximum(r, shift_hi(m, 2 * W))
        return r

    y1 = pool5(a)
    y2 = pool5(y1)
    y3 = pool5(y2)

    # cv2 on the channel concat (sublane axis, branch-major): ONE matmul with
    # K = 4*nb*c_ against the matching block-diagonal weight.
    cat = jnp.concatenate([a, y1, y2, y3], axis=0)        # (4*nb*c_, L)
    o = jnp.dot(w2_ref[...], cat, preferred_element_type=jnp.float32) + b2_ref[...]
    o_ref[...] = _silu(o).astype(o_ref.dtype)             # (nb*c2, L), unmasked store


# ------------------------- parameter preparation ---------------------------

def pick_images_per_step(N, c_):
    """Images stacked per grid step: fill the 8 f32 sublanes of the pool vregs
    (nb*c_ >= 8 when the batch allows), amortizing the ~0.35us/step grid cost.
    Must divide N.  For large batches this still leaves >= 2 'parallel' grid
    steps, keeping v7x's two TensorCores fed."""
    nb = min(N, max(1, 8 // max(c_, 1)))
    while N % nb:
        nb -= 1
    return nb


def build_kernel_params(p, images_per_step):
    """One-time constant transform (NOT per-call kernel work):
      * fold the BN scale into the conv weights (w' = s * w, keep only bias),
      * expand weights/biases to block-diagonal form so `images_per_step`
        images can be stacked on the sublane (channel) axis in one grid step."""
    nb = int(images_per_step)
    c_, c1 = p["w1"].shape
    c2 = p["w2"].shape[0]

    w1f = (p["w1"] * p["s1"]).astype(jnp.float32)          # (c_, c1)  BN folded
    w2f = (p["w2"] * p["s2"]).astype(jnp.float32)          # (c2, 4*c_)

    eye = jnp.eye(nb, dtype=jnp.float32)
    # W1bd[n*c_+o, m*c1+c] = eye[n,m] * w1f[o,c]
    w1bd = jnp.einsum("nm,oc->nomc", eye, w1f).reshape(nb * c_, nb * c1)
    # cat rows are branch-major: row = b*(nb*c_) + n*c_ + c
    # W2bd[n*c2+o, b*(nb*c_)+m*c_+c] = eye[n,m] * w2f[o, b*c_+c]
    w2bd = jnp.einsum("nm,obc->nobmc", eye,
                      w2f.reshape(c2, 4, c_)).reshape(nb * c2, 4 * nb * c_)
    b1bd = jnp.tile(p["b1"].astype(jnp.float32), (nb, 1))  # (nb*c_, 1)
    b2bd = jnp.tile(p["b2"].astype(jnp.float32), (nb, 1))  # (nb*c2, 1)

    return dict(nb=nb, c1=c1, c_=c_, c2=c2,
                w1=w1bd, b1=b1bd, w2=w2bd, b2=b2bd)


# ------------------------------ entry point ---------------------------------

def sppf(x, kp):
    """x: (N, c1, H, W) NCHW (same layout as PyTorch); kp: from build_kernel_params."""
    N, c1, H, W = x.shape
    nb, c2 = kp["nb"], kp["c2"]
    assert c1 == kp["c1"] and N % nb == 0, "batch/channels must match kernel params"
    HW = H * W
    n_steps = N // nb

    # Lane-dense slab: nb images' channels stacked on the sublane axis,
    # flattened H*W on the 128-lane axis.  Pure metadata reshape (row-major).
    xs = x.reshape(n_steps, nb * c1, HW)

    kernel = functools.partial(_sppf_kernel, H=H, W=W)
    out = pl.pallas_call(
        kernel,
        out_shape=jax.ShapeDtypeStruct((n_steps, nb * c2, HW), x.dtype),
        grid=(n_steps,),
        in_specs=[
            pl.BlockSpec((None, nb * c1, HW), lambda s: (s, 0, 0)),
            pl.BlockSpec(kp["w1"].shape, lambda s: (0, 0)),
            pl.BlockSpec(kp["b1"].shape, lambda s: (0, 0)),
            pl.BlockSpec(kp["w2"].shape, lambda s: (0, 0)),
            pl.BlockSpec(kp["b2"].shape, lambda s: (0, 0)),
        ],
        out_specs=pl.BlockSpec((None, nb * c2, HW), lambda s: (s, 0, 0)),
        compiler_params=pltpu.CompilerParams(
            dimension_semantics=("parallel",)),   # megacore-shardable on v7x
    )(xs, kp["w1"], kp["b1"], kp["w2"], kp["b2"])
    return out.reshape(N, c2, H, W)


# ----------------------------- raw parameters --------------------------------

def init_params(key, c1, c2, dtype=jnp.float32):
    c_ = c1 // 2
    keys = iter(jax.random.split(key, 16))

    def w(shape, scale=0.3):
        return jax.random.normal(next(keys), shape, dtype) * scale

    def bn(c, eps=1e-5):
        gamma = jax.random.uniform(next(keys), (c, 1), dtype, 0.5, 1.5)
        beta = jax.random.normal(next(keys), (c, 1), dtype) * 0.1
        mean = jax.random.normal(next(keys), (c, 1), dtype) * 0.1
        var = jax.random.uniform(next(keys), (c, 1), dtype, 0.5, 1.5)
        s = gamma / jnp.sqrt(var + eps)
        b = beta - mean * s
        return s, b

    p = {}
    p["w1"] = w((c_, c1))                 # cv1 1x1 conv weight, (c_out, c_in)
    p["s1"], p["b1"] = bn(c_)             # cv1 BN folded (eval mode)
    p["w2"] = w((c2, 4 * c_))             # cv2 1x1 conv weight, (c_out, 4*c_)
    p["s2"], p["b2"] = bn(c2)             # cv2 BN folded (eval mode)
    return p


# ---------------------- pure-JAX reference (for check) -----------------------

def _ref_forward(x, p):
    def cbs(x, w, s, b):     # 1x1 conv (no bias) + BN + SiLU, NCHW
        y = jnp.einsum("nchw,oc->nohw", x, w)
        y = y * s[None, :, :, None] + b[None, :, :, None]
        return y * jax.nn.sigmoid(y)

    def maxpool5(x):         # MaxPool2d(k=5, s=1, p=2): -inf padding semantics
        return jax.lax.reduce_window(
            x, -jnp.inf, jax.lax.max,
            window_dimensions=(1, 1, 5, 5), window_strides=(1, 1, 1, 1),
            padding=((0, 0), (0, 0), (2, 2), (2, 2)))

    a = cbs(x, p["w1"], p["s1"], p["b1"])
    y1 = maxpool5(a)
    y2 = maxpool5(y1)
    y3 = maxpool5(y2)
    cat = jnp.concatenate([a, y1, y2, y3], axis=1)
    return cbs(cat, p["w2"], p["s2"], p["b2"])


if __name__ == "__main__":
    key = jax.random.PRNGKey(0)
    kx, kp_key = jax.random.split(key)

    N, c1, c2, H, W = 2, 4, 4, 16, 16     # SPPF(c1=4, c2=4, k=5)
    x = jax.random.normal(kx, (N, c1, H, W), jnp.float32)   # NCHW like PyTorch
    params = init_params(kp_key, c1, c2)

    # One-time param prep: BN-fold + block-diagonal expansion for nb images/step.
    nb = pick_images_per_step(N, c1 // 2)
    kparams = build_kernel_params(params, nb)

    y = sppf(x, kparams)
    jax.block_until_ready(y)

    y_ref = _ref_forward(x, params)
    assert y.shape == (N, c2, H, W)
    err = float(jnp.max(jnp.abs(y - y_ref)))
    if not jnp.allclose(y, y_ref, rtol=1e-4, atol=1e-4):
        raise SystemExit("MISMATCH: max abs err = %g" % err)
    print("KERNEL_OK")
</pallas_src>

<mosaic_0001>
module attributes {stable_mosaic.version = 11 : i64} {
  func.func @_sppf_kernel(%arg0: i32, %arg1: memref<1x8x256xf32, #tpu.memory_space<vmem>>, %arg2: memref<4x8xf32, #tpu.memory_space<vmem>>, %arg3: memref<4x1xf32, #tpu.memory_space<vmem>>, %arg4: memref<8x16xf32, #tpu.memory_space<vmem>>, %arg5: memref<8x1xf32, #tpu.memory_space<vmem>>, %arg6: memref<1x8x256xf32, #tpu.memory_space<vmem>>) attributes {dimension_semantics = [#tpu.dimension_semantics<parallel>], iteration_bounds = array<i64: 1>, scalar_prefetch = 0 : i64, scratch_operands = 0 : i64, tpu.core_type = #tpu.core_type<tc>, window_params = [{transform_indices = @transform_0, window_bounds = array<i64: 1, 8, 256>}, {pipeline_mode = #tpu.pipeline_mode<synchronous>, transform_indices = @transform_1, window_bounds = array<i64: 4, 8>}, {pipeline_mode = #tpu.pipeline_mode<synchronous>, transform_indices = @transform_2, window_bounds = array<i64: 4, 1>}, {pipeline_mode = #tpu.pipeline_mode<synchronous>, transform_indices = @transform_3, window_bounds = array<i64: 8, 16>}, {pipeline_mode = #tpu.pipeline_mode<synchronous>, transform_indices = @transform_4, window_bounds = array<i64: 8, 1>}, {transform_indices = @transform_5, window_bounds = array<i64: 1, 8, 256>}]} {
    %c0 = arith.constant 0 : index
    %c0_0 = arith.constant 0 : index
    %c0_1 = arith.constant 0 : index
    %0 = vector.load %arg1[%c0, %c0_0, %c0_1] : memref<1x8x256xf32, #tpu.memory_space<vmem>>, vector<1x8x256xf32>
    %1 = vector.shape_cast %0 : vector<1x8x256xf32> to vector<8x256xf32>
    %c0_2 = arith.constant 0 : index
    %c0_3 = arith.constant 0 : index
    %2 = vector.load %arg2[%c0_2, %c0_3] : memref<4x8xf32, #tpu.memory_space<vmem>>, vector<4x8xf32>
    %cst = arith.constant dense<0.000000e+00> : vector<4x256xf32>
    %3 = tpu.matmul %2, %1, %cst {dimension_numbers = #tpu.dot_dimension_numbers<[1], [0], [0], [1], [0, 0, 1, 1], [], []>} : vector<4x8xf32>, vector<8x256xf32>, vector<4x256xf32> -> vector<4x256xf32>
    %c0_4 = arith.constant 0 : index
    %c0_5 = arith.constant 0 : index
    %4 = vector.load %arg3[%c0_4, %c0_5] : memref<4x1xf32, #tpu.memory_space<vmem>>, vector<4x1xf32>
    %5 = vector.broadcast %4 : vector<4x1xf32> to vector<4x256xf32>
    %6 = arith.addf %3, %5 : vector<4x256xf32>
    %cst_6 = arith.constant 5.000000e-01 : f32
    %7 = vector.broadcast %cst_6 : f32 to vector<4x256xf32>
    %8 = arith.mulf %7, %6 : vector<4x256xf32>
    %9 = math.tanh %8 : vector<4x256xf32>
    %cst_7 = arith.constant 5.000000e-01 : f32
    %10 = vector.broadcast %cst_7 : f32 to vector<4x256xf32>
    %11 = arith.mulf %10, %9 : vector<4x256xf32>
    %cst_8 = arith.constant 5.000000e-01 : f32
    %12 = vector.broadcast %cst_8 : f32 to vector<4x256xf32>
    %13 = arith.addf %11, %12 : vector<4x256xf32>
    %14 = arith.mulf %6, %13 : vector<4x256xf32>
    %15 = tpu.iota {dimensions = array<i32: 1>} : vector<4x256xi32>
    %c16_i32 = arith.constant 16 : i32
    %c0_i32 = arith.constant 0 : i32
    %16 = arith.cmpi eq, %c16_i32, %c0_i32 : i32
    %c1_i32 = arith.constant 1 : i32
    %17 = arith.select %16, %c1_i32, %c16_i32 : i32
    %18 = vector.broadcast %17 : i32 to vector<4x256xi32>
    %19 = arith.remsi %15, %18 : vector<4x256xi32>
    %c0_i32_9 = arith.constant 0 : i32
    %20 = vector.broadcast %c0_i32_9 : i32 to vector<4x256xi32>
    %21 = arith.cmpi ne, %19, %20 : vector<4x256xi32>
    %c0_i32_10 = arith.constant 0 : i32
    %22 = vector.broadcast %c0_i32_10 : i32 to vector<4x256xi32>
    %23 = arith.cmpi slt, %19, %22 : vector<4x256xi32>
    %c0_i32_11 = arith.constant 0 : i32
    %24 = arith.cmpi slt, %17, %c0_i32_11 : i32
    %25 = vector.broadcast %24 : i1 to vector<4x256xi1>
    %26 = vector.broadcast %25 : vector<4x256xi1> to vector<4x256xi1>
    %27 = arith.xori %23, %26 : vector<4x256xi1>
    %28 = arith.andi %27, %21 : vector<4x256xi1>
    %29 = vector.broadcast %17 : i32 to vector<4x256xi32>
    %30 = arith.addi %19, %29 : vector<4x256xi32>
    %31 = arith.select %28, %30, %19 : vector<4x256xi1>, vector<4x256xi32>
    %cst_12 = arith.constant -1.000000e+30 : f32
    %32 = vector.broadcast %cst_12 : f32 to vector<4x256xf32>
    %c1_i32_13 = arith.constant 1 : i32
    %33 = vector.broadcast %c1_i32_13 : i32 to vector<4x256xi32>
    %34 = arith.cmpi sge, %31, %33 : vector<4x256xi32>
    %c2_i32 = arith.constant 2 : i32
    %35 = vector.broadcast %c2_i32 : i32 to vector<4x256xi32>
    %36 = arith.cmpi sge, %31, %35 : vector<4x256xi32>
    %c15_i32 = arith.constant 15 : i32
    %37 = vector.broadcast %c15_i32 : i32 to vector<4x256xi32>
    %38 = arith.cmpi slt, %31, %37 : vector<4x256xi32>
    %c14_i32 = arith.constant 14 : i32
    %39 = vector.broadcast %c14_i32 : i32 to vector<4x256xi32>
    %40 = arith.cmpi slt, %31, %39 : vector<4x256xi32>
    %cst_14 = arith.constant -1.000000e+30 : f32
    %41 = vector.broadcast %cst_14 : f32 to vector<4x1xf32>
    %cst_15 = arith.constant -1.000000e+30 : f32
    %42 = vector.broadcast %cst_15 : f32 to vector<4x2xf32>
    %cst_16 = arith.constant -1.000000e+30 : f32
    %43 = vector.broadcast %cst_16 : f32 to vector<4x16xf32>
    %cst_17 = arith.constant -1.000000e+30 : f32
    %44 = vector.broadcast %cst_17 : f32 to vector<4x32xf32>
    %45 = vector.extract_strided_slice %14 {offsets = [0, 0], sizes = [4, 255], strides = [1, 1]} : vector<4x256xf32> to vector<4x255xf32>
    %46 = tpu.concatenate %41, %45 in 1 : vector<4x1xf32>, vector<4x255xf32> -> vector<4x256xf32>
    %47 = arith.select %34, %46, %32 : vector<4x256xi1>, vector<4x256xf32>
    %48 = arith.maximumf %14, %47 : vector<4x256xf32>
    %49 = vector.extract_strided_slice %14 {offsets = [0, 0], sizes = [4, 254], strides = [1, 1]} : vector<4x256xf32> to vector<4x254xf32>
    %50 = tpu.concatenate %42, %49 in 1 : vector<4x2xf32>, vector<4x254xf32> -> vector<4x256xf32>
    %51 = arith.select %36, %50, %32 : vector<4x256xi1>, vector<4x256xf32>
    %52 = arith.maximumf %48, %51 : vector<4x256xf32>
    %53 = vector.extract_strided_slice %14 {offsets = [0, 1], sizes = [4, 255], strides = [1, 1]} : vector<4x256xf32> to vector<4x255xf32>
    %54 = tpu.concatenate %53, %41 in 1 : vector<4x255xf32>, vector<4x1xf32> -> vector<4x256xf32>
    %55 = arith.select %38, %54, %32 : vector<4x256xi1>, vector<4x256xf32>
    %56 = arith.maximumf %52, %55 : vector<4x256xf32>
    %57 = vector.extract_strided_slice %14 {offsets = [0, 2], sizes = [4, 254], strides = [1, 1]} : vector<4x256xf32> to vector<4x254xf32>
    %58 = tpu.concatenate %57, %42 in 1 : vector<4x254xf32>, vector<4x2xf32> -> vector<4x256xf32>
    %59 = arith.select %40, %58, %32 : vector<4x256xi1>, vector<4x256xf32>
    %60 = arith.maximumf %56, %59 : vector<4x256xf32>
    %61 = vector.extract_strided_slice %60 {offsets = [0, 0], sizes = [4, 240], strides = [1, 1]} : vector<4x256xf32> to vector<4x240xf32>
    %62 = tpu.concatenate %43, %61 in 1 : vector<4x16xf32>, vector<4x240xf32> -> vector<4x256xf32>
    %63 = arith.maximumf %60, %62 : vector<4x256xf32>
    %64 = vector.extract_strided_slice %60 {offsets = [0, 0], sizes = [4, 224], strides = [1, 1]} : vector<4x256xf32> to vector<4x224xf32>
    %65 = tpu.concatenate %44, %64 in 1 : vector<4x32xf32>, vector<4x224xf32> -> vector<4x256xf32>
    %66 = arith.maximumf %63, %65 : vector<4x256xf32>
    %67 = vector.extract_strided_slice %60 {offsets = [0, 16], sizes = [4, 240], strides = [1, 1]} : vector<4x256xf32> to vector<4x240xf32>
    %68 = tpu.concatenate %67, %43 in 1 : vector<4x240xf32>, vector<4x16xf32> -> vector<4x256xf32>
    %69 = arith.maximumf %66, %68 : vector<4x256xf32>
    %70 = vector.extract_strided_slice %60 {offsets = [0, 32], sizes = [4, 224], strides = [1, 1]} : vector<4x256xf32> to vector<4x224xf32>
    %71 = tpu.concatenate %70, %44 in 1 : vector<4x224xf32>, vector<4x32xf32> -> vector<4x256xf32>
    %72 = arith.maximumf %69, %71 : vector<4x256xf32>
    %73 = vector.extract_strided_slice %72 {offsets = [0, 0], sizes = [4, 255], strides = [1, 1]} : vector<4x256xf32> to vector<4x255xf32>
    %74 = tpu.concatenate %41, %73 in 1 : vector<4x1xf32>, vector<4x255xf32> -> vector<4x256xf32>
    %75 = arith.select %34, %74, %32 : vector<4x256xi1>, vector<4x256xf32>
    %76 = arith.maximumf %72, %75 : vector<4x256xf32>
    %77 = vector.extract_strided_slice %72 {offsets = [0, 0], sizes = [4, 254], strides = [1, 1]} : vector<4x256xf32> to vector<4x254xf32>
    %78 = tpu.concatenate %42, %77 in 1 : vector<4x2xf32>, vector<4x254xf32> -> vector<4x256xf32>
    %79 = arith.select %36, %78, %32 : vector<4x256xi1>, vector<4x256xf32>
    %80 = arith.maximumf %76, %79 : vector<4x256xf32>
    %81 = vector.extract_strided_slice %72 {offsets = [0, 1], sizes = [4, 255], strides = [1, 1]} : vector<4x256xf32> to vector<4x255xf32>
    %82 = tpu.concatenate %81, %41 in 1 : vector<4x255xf32>, vector<4x1xf32> -> vector<4x256xf32>
    %83 = arith.select %38, %82, %32 : vector<4x256xi1>, vector<4x256xf32>
    %84 = arith.maximumf %80, %83 : vector<4x256xf32>
    %85 = vector.extract_strided_slice %72 {offsets = [0, 2], sizes = [4, 254], strides = [1, 1]} : vector<4x256xf32> to vector<4x254xf32>
    %86 = tpu.concatenate %85, %42 in 1 : vector<4x254xf32>, vector<4x2xf32> -> vector<4x256xf32>
    %87 = arith.select %40, %86, %32 : vector<4x256xi1>, vector<4x256xf32>
    %88 = arith.maximumf %84, %87 : vector<4x256xf32>
    %89 = vector.extract_strided_slice %88 {offsets = [0, 0], sizes = [4, 240], strides = [1, 1]} : vector<4x256xf32> to vector<4x240xf32>
    %90 = tpu.concatenate %43, %89 in 1 : vector<4x16xf32>, vector<4x240xf32> -> vector<4x256xf32>
    %91 = arith.maximumf %88, %90 : vector<4x256xf32>
    %92 = vector.extract_strided_slice %88 {offsets = [0, 0], sizes = [4, 224], strides = [1, 1]} : vector<4x256xf32> to vector<4x224xf32>
    %93 = tpu.concatenate %44, %92 in 1 : vector<4x32xf32>, vector<4x224xf32> -> vector<4x256xf32>
    %94 = arith.maximumf %91, %93 : vector<4x256xf32>
    %95 = vector.extract_strided_slice %88 {offsets = [0, 16], sizes = [4, 240], strides = [1, 1]} : vector<4x256xf32> to vector<4x240xf32>
    %96 = tpu.concatenate %95, %43 in 1 : vector<4x240xf32>, vector<4x16xf32> -> vector<4x256xf32>
    %97 = arith.maximumf %94, %96 : vector<4x256xf32>
    %98 = vector.extract_strided_slice %88 {offsets = [0, 32], sizes = [4, 224], strides = [1, 1]} : vector<4x256xf32> to vector<4x224xf32>
    %99 = tpu.concatenate %98, %44 in 1 : vector<4x224xf32>, vector<4x32xf32> -> vector<4x256xf32>
    %100 = arith.maximumf %97, %99 : vector<4x256xf32>
    %101 = vector.extract_strided_slice %100 {offsets = [0, 0], sizes = [4, 255], strides = [1, 1]} : vector<4x256xf32> to vector<4x255xf32>
    %102 = tpu.concatenate %41, %101 in 1 : vector<4x1xf32>, vector<4x255xf32> -> vector<4x256xf32>
    %103 = arith.select %34, %102, %32 : vector<4x256xi1>, vector<4x256xf32>
    %104 = arith.maximumf %100, %103 : vector<4x256xf32>
    %105 = vector.extract_strided_slice %100 {offsets = [0, 0], sizes = [4, 254], strides = [1, 1]} : vector<4x256xf32> to vector<4x254xf32>
    %106 = tpu.concatenate %42, %105 in 1 : vector<4x2xf32>, vector<4x254xf32> -> vector<4x256xf32>
    %107 = arith.select %36, %106, %32 : vector<4x256xi1>, vector<4x256xf32>
    %108 = arith.maximumf %104, %107 : vector<4x256xf32>
    %109 = vector.extract_strided_slice %100 {offsets = [0, 1], sizes = [4, 255], strides = [1, 1]} : vector<4x256xf32> to vector<4x255xf32>
    %110 = tpu.concatenate %109, %41 in 1 : vector<4x255xf32>, vector<4x1xf32> -> vector<4x256xf32>
    %111 = arith.select %38, %110, %32 : vector<4x256xi1>, vector<4x256xf32>
    %112 = arith.maximumf %108, %111 : vector<4x256xf32>
    %113 = vector.extract_strided_slice %100 {offsets = [0, 2], sizes = [4, 254], strides = [1, 1]} : vector<4x256xf32> to vector<4x254xf32>
    %114 = tpu.concatenate %113, %42 in 1 : vector<4x254xf32>, vector<4x2xf32> -> vector<4x256xf32>
    %115 = arith.select %40, %114, %32 : vector<4x256xi1>, vector<4x256xf32>
    %116 = arith.maximumf %112, %115 : vector<4x256xf32>
    %117 = vector.extract_strided_slice %116 {offsets = [0, 0], sizes = [4, 240], strides = [1, 1]} : vector<4x256xf32> to vector<4x240xf32>
    %118 = tpu.concatenate %43, %117 in 1 : vector<4x16xf32>, vector<4x240xf32> -> vector<4x256xf32>
    %119 = arith.maximumf %116, %118 : vector<4x256xf32>
    %120 = vector.extract_strided_slice %116 {offsets = [0, 0], sizes = [4, 224], strides = [1, 1]} : vector<4x256xf32> to vector<4x224xf32>
    %121 = tpu.concatenate %44, %120 in 1 : vector<4x32xf32>, vector<4x224xf32> -> vector<4x256xf32>
    %122 = arith.maximumf %119, %121 : vector<4x256xf32>
    %123 = vector.extract_strided_slice %116 {offsets = [0, 16], sizes = [4, 240], strides = [1, 1]} : vector<4x256xf32> to vector<4x240xf32>
    %124 = tpu.concatenate %123, %43 in 1 : vector<4x240xf32>, vector<4x16xf32> -> vector<4x256xf32>
    %125 = arith.maximumf %122, %124 : vector<4x256xf32>
    %126 = vector.extract_strided_slice %116 {offsets = [0, 32], sizes = [4, 224], strides = [1, 1]} : vector<4x256xf32> to vector<4x224xf32>
    %127 = tpu.concatenate %126, %44 in 1 : vector<4x224xf32>, vector<4x32xf32> -> vector<4x256xf32>
    %128 = arith.maximumf %125, %127 : vector<4x256xf32>
    %129 = tpu.concatenate %14, %72, %100, %128 in 0 : vector<4x256xf32>, vector<4x256xf32>, vector<4x256xf32>, vector<4x256xf32> -> vector<16x256xf32>
    %c0_18 = arith.constant 0 : index
    %c0_19 = arith.constant 0 : index
    %130 = vector.load %arg4[%c0_18, %c0_19] : memref<8x16xf32, #tpu.memory_space<vmem>>, vector<8x16xf32>
    %cst_20 = arith.constant dense<0.000000e+00> : vector<8x256xf32>
    %131 = tpu.matmul %130, %129, %cst_20 {dimension_numbers = #tpu.dot_dimension_numbers<[1], [0], [0], [1], [0, 0, 1, 1], [], []>} : vector<8x16xf32>, vector<16x256xf32>, vector<8x256xf32> -> vector<8x256xf32>
    %c0_21 = arith.constant 0 : index
    %c0_22 = arith.constant 0 : index
    %132 = vector.load %arg5[%c0_21, %c0_22] : memref<8x1xf32, #tpu.memory_space<vmem>>, vector<8x1xf32>
    %133 = vector.broadcast %132 : vector<8x1xf32> to vector<8x256xf32>
    %134 = arith.addf %131, %133 : vector<8x256xf32>
    %cst_23 = arith.constant 5.000000e-01 : f32
    %135 = vector.broadcast %cst_23 : f32 to vector<8x256xf32>
    %136 = arith.mulf %135, %134 : vector<8x256xf32>
    %137 = math.tanh %136 : vector<8x256xf32>
    %cst_24 = arith.constant 5.000000e-01 : f32
    %138 = vector.broadcast %cst_24 : f32 to vector<8x256xf32>
    %139 = arith.mulf %138, %137 : vector<8x256xf32>
    %cst_25 = arith.constant 5.000000e-01 : f32
    %140 = vector.broadcast %cst_25 : f32 to vector<8x256xf32>
    %141 = arith.addf %139, %140 : vector<8x256xf32>
    %142 = arith.mulf %134, %141 : vector<8x256xf32>
    %c0_26 = arith.constant 0 : index
    %c0_27 = arith.constant 0 : index
    %c0_28 = arith.constant 0 : index
    %143 = vector.load %arg6[%c0_26, %c0_27, %c0_28] : memref<1x8x256xf32, #tpu.memory_space<vmem>>, vector<1x8x256xf32>
    %144 = vector.shape_cast %143 : vector<1x8x256xf32> to vector<8x256xf32>
    %145 = vector.shape_cast %142 : vector<8x256xf32> to vector<1x8x256xf32>
    tpu.vector_store %arg6[%c0_26, %c0_27, %c0_28], %145 {strides = array<i32>} : memref<1x8x256xf32, #tpu.memory_space<vmem>>, vector<1x8x256xf32>,
    return
  }
  func.func @transform_0(%arg0: i32) -> (i32, i32, i32) {
    %c0_i32 = arith.constant 0 : i32
    %c0_i32_0 = arith.constant 0 : i32
    %c0_i32_1 = arith.constant 0 : i32
    return %arg0, %c0_i32, %c0_i32_0 : i32, i32, i32
  }
  func.func @transform_1(%arg0: i32) -> (i32, i32) {
    %c0_i32 = arith.constant 0 : i32
    %c0_i32_0 = arith.constant 0 : i32
    %c0_i32_1 = arith.constant 0 : i32
    return %c0_i32, %c0_i32_0 : i32, i32
  }
  func.func @transform_2(%arg0: i32) -> (i32, i32) {
    %c0_i32 = arith.constant 0 : i32
    %c0_i32_0 = arith.constant 0 : i32
    %c0_i32_1 = arith.constant 0 : i32
    return %c0_i32, %c0_i32_0 : i32, i32
  }
  func.func @transform_3(%arg0: i32) -> (i32, i32) {
    %c0_i32 = arith.constant 0 : i32
    %c0_i32_0 = arith.constant 0 : i32
    %c0_i32_1 = arith.constant 0 : i32
    return %c0_i32, %c0_i32_0 : i32, i32
  }
  func.func @transform_4(%arg0: i32) -> (i32, i32) {
    %c0_i32 = arith.constant 0 : i32
    %c0_i32_0 = arith.constant 0 : i32
    %c0_i32_1 = arith.constant 0 : i32
    return %c0_i32, %c0_i32_0 : i32, i32
  }
  func.func @transform_5(%arg0: i32) -> (i32, i32, i32) {
    %c0_i32 = arith.constant 0 : i32
    %c0_i32_0 = arith.constant 0 : i32
    %c0_i32_1 = arith.constant 0 : i32
    return %arg0, %c0_i32, %c0_i32_0 : i32, i32, i32
  }
}

</mosaic_0001>

<llo_original>
// kernel: tpu_custom_call.1
$region0: #{tpu_custom_call.1}
  #allocation0 [shape = 'u32[]', space=smem, size = 0x4, offset = 0x4, fixed_abs, tag = 'smem constant byte address 0x4 - core index']
  #allocation1 [shape = 'u32[144,128]{1,0:T(1,128)}', space=vmem, size = 0x12000, scoped, tag = 'internal scratch']
  %s0 = inlined_call_operand.hbm [shape: f32[1,8,256], index: 0, kind: input, shape index: {}]
  %s1 = inlined_call_operand.vmem [shape: f32[4,8], index: 1, kind: input, shape index: {}]
  %s2 = inlined_call_operand.vmem [shape: f32[4,1], index: 2, kind: input, shape index: {}]
  %s3 = inlined_call_operand.vmem [shape: f32[8,16], index: 3, kind: input, shape index: {}]
  %s4 = inlined_call_operand.vmem [shape: f32[8,1], index: 4, kind: input, shape index: {}]
  %s5 = inlined_call_operand.hbm [shape: f32[1,8,256], index: 5, kind: output, shape index: {}]
  %s6 = sld [smem:[#allocation0]]
  $region34: #{tpu_custom_call.1} parent=0
    _
  %s8 = ssub.s32 1, %s6
  %s9 = scalar_select 0, %s8, %s6
  $region1: #{tpu_custom_call.1} parent=0
    #allocation2 [shape = 'u8[8192]{0}', space=vmem, size = 0x2000, scoped, tag = 'input window, operand 0, single buffered']
    #allocation3 [shape = 's32[1]{0}', space=sflag, size = 0x4, scoped, tag = 'scoped memory for tpu_custom_call.1']
    #allocation4 [shape = 's32[1]{0}', space=sflag, size = 0x4, scoped, tag = 'scoped memory for tpu_custom_call.1']
    #allocation5 [shape = 'u8[8192]{0}', space=vmem, size = 0x2000, scoped, tag = 'output window, operand 0, single buffered']
    %10 = vsyncpa [#allocation3], 0
    %11 = vsyncpa [#allocation4], 0
    // Predicated region
    $region2: #{tpu_custom_call.1} parent=1 // pred_check
      _
    $region3: #{tpu_custom_call.1} parent=1 // pred_check_branch
      %13 = sbr.rel (0) target = $region5
    $region4: #{tpu_custom_call.1} parent=1 // pred_region
      %s15 = ssub.s32 256, 256
      %16 = vsyncadd [#allocation3], %s15
      %s18 = sshll.u32 [#allocation2], 4
      %s19 = int_to_ptr.vmem [resolvable:$true] %s18
      %21 = dma.hbm_to_vmem [thread:$0]  %s0, 256, %s19, [#allocation3]
    $region5: #{tpu_custom_call.1} parent=1 // pred_fallthru
      _
    // Predicated region
    $region6: #{tpu_custom_call.1} parent=1 // pred_check
      _
    $region7: #{tpu_custom_call.1} parent=1 // pred_check_branch
      %23 = sbr.rel (0) target = $region9
    $region8: #{tpu_custom_call.1} parent=1 // pred_region
      _
    $region9: #{tpu_custom_call.1} parent=1 // pred_fallthru
      _
    // Predicated region
    $region10: #{tpu_custom_call.1} parent=1 // pred_check
      _
    $region11: #{tpu_custom_call.1} parent=1 // pred_check_branch
      %25 = sbr.rel (0) target = $region13
    $region12: #{tpu_custom_call.1} parent=1 // pred_region
      _
    $region13: #{tpu_custom_call.1} parent=1 // pred_fallthru
      _
    // Predicated region
    $region14: #{tpu_custom_call.1} parent=1 // pred_check
      _
    $region15: #{tpu_custom_call.1} parent=1 // pred_check_branch
      %27 = sbr.rel (0) target = $region17
    $region16: #{tpu_custom_call.1} parent=1 // pred_region
      _
    $region17: #{tpu_custom_call.1} parent=1 // pred_fallthru
      _
    // Predicated region
    $region18: #{tpu_custom_call.1} parent=1 // pred_check
      _
    $region19: #{tpu_custom_call.1} parent=1 // pred_check_branch
      %29 = sbr.rel (0) target = $region21
    $region20: #{tpu_custom_call.1} parent=1 // pred_region
      _
    $region21: #{tpu_custom_call.1} parent=1 // pred_fallthru
      _
    // Predicated region
    $region22: #{tpu_custom_call.1} parent=1 // pred_check
      _
    $region23: #{tpu_custom_call.1} parent=1 // pred_check_branch
      %31 = sbr.rel (0) target = $region25
    $region24: #{tpu_custom_call.1} parent=1 // pred_region
      %32 = dma.done [#allocation3], 256
    $region25: #{tpu_custom_call.1} parent=1 // pred_fallthru
      _
    %v33 = vld [vmem:[#allocation2] sm:$0xff]
    %v34 = vld [vmem:[#allocation2 + $0x8] sm:$0xff]
    %v35 = vld [vmem:[%s1] sm:$0xf]
    %v36 = vld [vmem:[%s2] sm:$0xf]
    %38 = vset.pattern.permute.xlu0 0
    %39 = vperm.xlu0 %38, %v36
    %v40 = vpop.permute.xlu0 %39
    %vm42 = vcmask 64512
    %v44 = vsel %vm42, %v35, 0
    %46 = vmatprep.subr.mxu0 %v34
    %47 = vmatpush1.msra.mxu0 %v33
    %48 = vmatprep.subr.mxu0 0.0
    %49 = vmatpush1.msra.mxu0 0.0
    %50 = vmatprep.subr.mxu0 0.0
    %51 = vmatpush1.msra.mxu0 0.0
    %52 = vmatprep.subr.mxu0 0.0
    %53 = vmatpush1.msra.mxu0 0.0
    %54 = vmatprep.subr.mxu0 0.0
    %55 = vmatpush1.msra.mxu0 0.0
    %56 = vmatprep.subr.mxu0 0.0
    %57 = vmatpush1.msra.mxu0 0.0
    %58 = vmatprep.subr.mxu0 0.0
    %59 = vmatpush1.msra.mxu0 0.0
    %60 = vmatprep.subr.mxu0 0.0
    %61 = vmatpush1.msra.mxu0 0.0
    %62 = vmatprep.subr.mxu0 0.0
    %63 = vmatpush1.msra.mxu0 0.0
    %64 = vmatprep.subr.mxu0 0.0
    %65 = vmatpush1.msra.mxu0 0.0
    %66 = vmatprep.subr.mxu0 0.0
    %67 = vmatpush1.msra.mxu0 0.0
    %68 = vmatprep.subr.mxu0 0.0
    %69 = vmatpush1.msra.mxu0 0.0
    %70 = vmatprep.subr.mxu0 0.0
    %71 = vmatpush1.msra.mxu0 0.0
    %72 = vmatprep.subr.mxu0 0.0
    %73 = vmatpush1.msra.mxu0 0.0
    %74 = vmatprep.subr.mxu0 0.0
    %75 = vmatpush1.msra.mxu0 0.0
    %76 = vmatprep.subr.mxu0 0.0
    %77 = vmatpush1.msra.mxu0 0.0
    %78 = vmatprep.subr.mxu0 0.0
    %79 = vmatpush1.msra.mxu0 0.0
    %80 = vmatprep.subr.mxu0 0.0
    %81 = vmatpush1.msra.mxu0 0.0
    %82 = vmatprep.subr.mxu0 0.0
    %83 = vmatpush1.msra.mxu0 0.0
    %84 = vmatprep.subr.mxu0 0.0
    %85 = vmatpush1.msra.mxu0 0.0
    %86 = vmatprep.subr.mxu0 0.0
    %87 = vmatpush1.msra.mxu0 0.0
    %88 = vmatprep.subr.mxu0 0.0
    %89 = vmatpush1.msra.mxu0 0.0
    %90 = vmatprep.subr.mxu0 0.0
    %91 = vmatpush1.msra.mxu0 0.0
    %92 = vmatprep.subr.mxu0 0.0
    %93 = vmatpush1.msra.mxu0 0.0
    %94 = vmatprep.subr.mxu0 0.0
    %95 = vmatpush1.msra.mxu0 0.0
    %96 = vmatprep.subr.mxu0 0.0
    %97 = vmatpush1.msra.mxu0 0.0
    %98 = vmatprep.subr.mxu0 0.0
    %99 = vmatpush1.msra.mxu0 0.0
    %100 = vmatprep.subr.mxu0 0.0
    %101 = vmatpush1.msra.mxu0 0.0
    %102 = vmatprep.subr.mxu0 0.0
    %103 = vmatpush1.msra.mxu0 0.0
    %104 = vmatprep.subr.mxu0 0.0
    %105 = vmatpush1.msra.mxu0 0.0
    %106 = vmatprep.subr.mxu0 0.0
    %107 = vmatpush1.msra.mxu0 0.0
    %108 = vmatprep.subr.mxu0 0.0
    %109 = vmatpush1.msra.mxu0 0.0
    %110 = vmatprep.mubr.f32.mxu0 0.0
    %111 = vmatmul.mubr.f32.gmra.mrb[0].mxu0 %v44
    %v112 = vpop.f32.mrb[0].mxu0
    %v113 = vadd.f32 %v40, %v112
    %v114 = vpop.f32.mrb[0].mxu0
    %v115 = vadd.f32 %v40, %v114
    %116 = vdwg.mxu0
    %v117 = vmul.f32 %v113, 0.5
    %v118 = vmul.f32 %v115, 0.5
    %v119 = vtanh.pop %v117
    %v120 = vtanh.pop %v118
    %v121 = vmul.f32 %v119, 0.5
    %v122 = vmul.f32 %v120, 0.5
    %v123 = vadd.f32 %v121, 0.5
    %v124 = vadd.f32 %v122, 0.5
    %v125 = vmul.f32 %v113, %v123
    %v126 = vmul.f32 %v115, %v124
    %v127 = vlaneseq
    %v128 = vand.u32 %v127, 127
    %v129 = vadd.s32 %v128, 128
    %vm130 = vcmp.lt.s32.totalorder %v128, 0
    %v131 = vsub.s32 0, %v128
    %v132 = vsel %vm130, %v131, %v128
    %v133 = vshrl.u32 %v132, 4
    %v134 = vand.u32 %v132, 15
    %v135 = vsub.s32 0, %v134
    %v136 = vsel %vm130, %v135, %v134
    %vm137 = vcmp.lt.s32.totalorder %v129, 0
    %v138 = vsub.s32 0, %v129
    %v139 = vsel %vm137, %v138, %v129
    %v140 = vshrl.u32 %v139, 4
    %v141 = vand.u32 %v139, 15
    %v142 = vsub.s32 0, %v141
    %v143 = vsel %vm137, %v142, %v141
    %vm144 = vcmp.ne.s32.totalorder %v136, 0
    %vm145 = vcmp.ne.s32.totalorder %v143, 0
    %vm146 = vcmp.lt.s32.totalorder %v136, 0
    %vm147 = vcmp.lt.s32.totalorder %v143, 0
    %vm148 = vmand %vm146, %vm144
    %vm149 = vmand %vm147, %vm145
    %v150 = vadd.s32 %v136, 16
    %v151 = vadd.s32 %v143, 16
    %v152 = vsel %vm148, %v150, %v136
    %v153 = vsel %vm149, %v151, %v143
    %vm154 = vcmp.ge.s32.totalorder %v152, 1
    %vm155 = vcmp.ge.s32.totalorder %v153, 1
    %vm156 = vcmp.ge.s32.totalorder %v152, 2
    %vm157 = vcmp.ge.s32.totalorder %v153, 2
    %vm158 = vcmp.lt.s32.totalorder %v152, 15
    %vm159 = vcmp.lt.s32.totalorder %v153, 15
    %vm160 = vcmp.lt.s32.totalorder %v152, 14
    %vm161 = vcmp.lt.s32.totalorder %v153, 14
    %164 = vrot.lane.b32.xlu0 %v125, 1
    %v165 = vpop.permute.xlu0 %164
    %166 = vrot.lane.b32.xlu0 %v126, 1
    %v167 = vpop.permute.xlu0 %166
    %vm168 = vcmask 7168
    %v169 = vsel %vm168, %v165, %v167
    %v172 = vsel %vm168, -1e+30, %v165
    %v173 = vsel %vm154, %v172, -1e+30
    %v174 = vsel %vm155, %v169, -1e+30
    %v175 = vmax.f32 %v125, %v173
    %v176 = vmax.f32 %v126, %v174
    %177 = vrot.lane.b32.xlu0 %v125, 2
    %v178 = vpop.permute.xlu0 %177
    %179 = vrot.lane.b32.xlu0 %v126, 2
    %v180 = vpop.permute.xlu0 %179
    %vm181 = vcmask 15360
    %v182 = vsel %vm181, %v178, %v180
    %v185 = vsel %vm181, -1e+30, %v178
    %v186 = vsel %vm156, %v185, -1e+30
    %v187 = vsel %vm157, %v182, -1e+30
    %v188 = vmax.f32 %v175, %v186
    %v189 = vmax.f32 %v176, %v187
    %190 = vrot.lane.b32.xlu0 %v125, 127
    %v191 = vpop.permute.xlu0 %190
    %192 = vrot.lane.b32.xlu0 %v126, 127
    %v193 = vpop.permute.xlu0 %192
    %vm194 = vcmask 1039360
    %v195 = vsel %vm194, %v191, %v193
    %v198 = vsel %vm194, %v193, -1e+30
    %v199 = vsel %vm158, %v195, -1e+30
    %v200 = vsel %vm159, %v198, -1e+30
    %v201 = vmax.f32 %v188, %v199
    %v202 = vmax.f32 %v189, %v200
    %203 = vrot.lane.b32.xlu0 %v125, 126
    %v204 = vpop.permute.xlu0 %203
    %205 = vrot.lane.b32.xlu0 %v126, 126
    %v206 = vpop.permute.xlu0 %205
    %vm207 = vcmask 1031168
    %v208 = vsel %vm207, %v204, %v206
    %v211 = vsel %vm207, %v206, -1e+30
    %v212 = vsel %vm160, %v208, -1e+30
    %v213 = vsel %vm161, %v211, -1e+30
    %v214 = vmax.f32 %v201, %v212
    %v215 = vmax.f32 %v202, %v213
    %218 = vrot.lane.b32.xlu0 %v214, 16
    %v219 = vpop.permute.xlu0 %218
    %220 = vrot.lane.b32.xlu0 %v215, 16
    %v221 = vpop.permute.xlu0 %220
    %vm222 = vcmask 130048
    %v223 = vsel %vm222, %v219, %v221
    %v226 = vsel %vm222, -1e+30, %v219
    %v227 = vmax.f32 %v214, %v226
    %v228 = vmax.f32 %v215, %v223
    %229 = vrot.lane.b32.xlu0 %v214, 32
    %v230 = vpop.permute.xlu0 %229
    %231 = vrot.lane.b32.xlu0 %v215, 32
    %v232 = vpop.permute.xlu0 %231
    %vm233 = vcmask 261120
    %v234 = vsel %vm233, %v230, %v232
    %v237 = vsel %vm233, -1e+30, %v230
    %v238 = vmax.f32 %v227, %v237
    %v239 = vmax.f32 %v228, %v234
    %240 = vrot.lane.b32.xlu0 %v214, 112
    %v241 = vpop.permute.xlu0 %240
    %242 = vrot.lane.b32.xlu0 %v215, 112
    %v243 = vpop.permute.xlu0 %242
    %vm244 = vcmask 916480
    %v245 = vsel %vm244, %v241, %v243
    %v248 = vsel %vm244, %v243, -1e+30
    %v249 = vmax.f32 %v238, %v245
    %v250 = vmax.f32 %v239, %v248
    %251 = vrot.lane.b32.xlu0 %v214, 96
    %v252 = vpop.permute.xlu0 %251
    %253 = vrot.lane.b32.xlu0 %v215, 96
    %v254 = vpop.permute.xlu0 %253
    %vm255 = vcmask 785408
    %v256 = vsel %vm255, %v252, %v254
    %v259 = vsel %vm255, %v254, -1e+30
    %v260 = vmax.f32 %v249, %v256
    %v261 = vmax.f32 %v250, %v259
    %264 = vrot.lane.b32.xlu0 %v260, 1
    %v265 = vpop.permute.xlu0 %264
    %266 = vrot.lane.b32.xlu0 %v261, 1
    %v267 = vpop.permute.xlu0 %266
    %v268 = vsel %vm168, %v265, %v267
    %v271 = vsel %vm168, -1e+30, %v265
    %v272 = vsel %vm154, %v271, -1e+30
    %v273 = vsel %vm155, %v268, -1e+30
    %v274 = vmax.f32 %v260, %v272
    %v275 = vmax.f32 %v261, %v273
    %276 = vrot.lane.b32.xlu0 %v260, 2
    %v277 = vpop.permute.xlu0 %276
    %278 = vrot.lane.b32.xlu0 %v261, 2
    %v279 = vpop.permute.xlu0 %278
    %v280 = vsel %vm181, %v277, %v279
    %v283 = vsel %vm181, -1e+30, %v277
    %v284 = vsel %vm156, %v283, -1e+30
    %v285 = vsel %vm157, %v280, -1e+30
    %v286 = vmax.f32 %v274, %v284
    %v287 = vmax.f32 %v275, %v285
    %288 = vrot.lane.b32.xlu0 %v260, 127
    %v289 = vpop.permute.xlu0 %288
    %290 = vrot.lane.b32.xlu0 %v261, 127
    %v291 = vpop.permute.xlu0 %290
    %v292 = vsel %vm194, %v289, %v291
    %v295 = vsel %vm194, %v291, -1e+30
    %v296 = vsel %vm158, %v292, -1e+30
    %v297 = vsel %vm159, %v295, -1e+30
    %v298 = vmax.f32 %v286, %v296
    %v299 = vmax.f32 %v287, %v297
    %300 = vrot.lane.b32.xlu0 %v260, 126
    %v301 = vpop.permute.xlu0 %300
    %302 = vrot.lane.b32.xlu0 %v261, 126
    %v303 = vpop.permute.xlu0 %302
    %v304 = vsel %vm207, %v301, %v303
    %v307 = vsel %vm207, %v303, -1e+30
    %v308 = vsel %vm160, %v304, -1e+30
    %v309 = vsel %vm161, %v307, -1e+30
    %v310 = vmax.f32 %v298, %v308
    %v311 = vmax.f32 %v299, %v309
    %314 = vrot.lane.b32.xlu0 %v310, 16
    %v315 = vpop.permute.xlu0 %314
    %316 = vrot.lane.b32.xlu0 %v311, 16
    %v317 = vpop.permute.xlu0 %316
    %v318 = vsel %vm222, %v315, %v317
    %v321 = vsel %vm222, -1e+30, %v315
    %v322 = vmax.f32 %v310, %v321
    %v323 = vmax.f32 %v311, %v318
    %324 = vrot.lane.b32.xlu0 %v310, 32
    %v325 = vpop.permute.xlu0 %324
    %326 = vrot.lane.b32.xlu0 %v311, 32
    %v327 = vpop.permute.xlu0 %326
    %v328 = vsel %vm233, %v325, %v327
    %v331 = vsel %vm233, -1e+30, %v325
    %v332 = vmax.f32 %v322, %v331
    %v333 = vmax.f32 %v323, %v328
    %334 = vrot.lane.b32.xlu0 %v310, 112
    %v335 = vpop.permute.xlu0 %334
    %336 = vrot.lane.b32.xlu0 %v311, 112
    %v337 = vpop.permute.xlu0 %336
    %v338 = vsel %vm244, %v335, %v337
    %v341 = vsel %vm244, %v337, -1e+30
    %v342 = vmax.f32 %v332, %v338
    %v343 = vmax.f32 %v333, %v341
    %344 = vrot.lane.b32.xlu0 %v310, 96
    %v345 = vpop.permute.xlu0 %344
    %346 = vrot.lane.b32.xlu0 %v311, 96
    %v347 = vpop.permute.xlu0 %346
    %v348 = vsel %vm255, %v345, %v347
    %v351 = vsel %vm255, %v347, -1e+30
    %v352 = vmax.f32 %v342, %v348
    %v353 = vmax.f32 %v343, %v351
    %356 = vrot.lane.b32.xlu0 %v352, 1
    %v357 = vpop.permute.xlu0 %356
    %358 = vrot.lane.b32.xlu0 %v353, 1
    %v359 = vpop.permute.xlu0 %358
    %v360 = vsel %vm168, %v357, %v359
    %v363 = vsel %vm168, -1e+30, %v357
    %v364 = vsel %vm154, %v363, -1e+30
    %v365 = vsel %vm155, %v360, -1e+30
    %v366 = vmax.f32 %v352, %v364
    %v367 = vmax.f32 %v353, %v365
    %368 = vrot.lane.b32.xlu0 %v352, 2
    %v369 = vpop.permute.xlu0 %368
    %370 = vrot.lane.b32.xlu0 %v353, 2
    %v371 = vpop.permute.xlu0 %370
    %v372 = vsel %vm181, %v369, %v371
    %v375 = vsel %vm181, -1e+30, %v369
    %v376 = vsel %vm156, %v375, -1e+30
    %v377 = vsel %vm157, %v372, -1e+30
    %v378 = vmax.f32 %v366, %v376
    %v379 = vmax.f32 %v367, %v377
    %380 = vrot.lane.b32.xlu0 %v352, 127
    %v381 = vpop.permute.xlu0 %380
    %382 = vrot.lane.b32.xlu0 %v353, 127
    %v383 = vpop.permute.xlu0 %382
    %v384 = vsel %vm194, %v381, %v383
    %v387 = vsel %vm194, %v383, -1e+30
    %v388 = vsel %vm158, %v384, -1e+30
    %v389 = vsel %vm159, %v387, -1e+30
    %v390 = vmax.f32 %v378, %v388
    %v391 = vmax.f32 %v379, %v389
    %392 = vrot.lane.b32.xlu0 %v352, 126
    %v393 = vpop.permute.xlu0 %392
    %394 = vrot.lane.b32.xlu0 %v353, 126
    %v395 = vpop.permute.xlu0 %394
    %v396 = vsel %vm207, %v393, %v395
    %v399 = vsel %vm207, %v395, -1e+30
    %v400 = vsel %vm160, %v396, -1e+30
    %v401 = vsel %vm161, %v399, -1e+30
    %v402 = vmax.f32 %v390, %v400
    %v403 = vmax.f32 %v391, %v401
    %406 = vrot.lane.b32.xlu0 %v402, 16
    %v407 = vpop.permute.xlu0 %406
    %408 = vrot.lane.b32.xlu0 %v403, 16
    %v409 = vpop.permute.xlu0 %408
    %v410 = vsel %vm222, %v407, %v409
    %v413 = vsel %vm222, -1e+30, %v407
    %v414 = vmax.f32 %v402, %v413
    %v415 = vmax.f32 %v403, %v410
    %416 = vrot.lane.b32.xlu0 %v402, 32
    %v417 = vpop.permute.xlu0 %416
    %418 = vrot.lane.b32.xlu0 %v403, 32
    %v419 = vpop.permute.xlu0 %418
    %v420 = vsel %vm233, %v417, %v419
    %v423 = vsel %vm233, -1e+30, %v417
    %v424 = vmax.f32 %v414, %v423
    %v425 = vmax.f32 %v415, %v420
    %426 = vrot.lane.b32.xlu0 %v402, 112
    %v427 = vpop.permute.xlu0 %426
    %428 = vrot.lane.b32.xlu0 %v403, 112
    %v429 = vpop.permute.xlu0 %428
    %v430 = vsel %vm244, %v427, %v429
    %v433 = vsel %vm244, %v429, -1e+30
    %v434 = vmax.f32 %v424, %v430
    %v435 = vmax.f32 %v425, %v433
    %436 = vrot.lane.b32.xlu0 %v402, 96
    %v437 = vpop.permute.xlu0 %436
    %438 = vrot.lane.b32.xlu0 %v403, 96
    %v439 = vpop.permute.xlu0 %438
    %v440 = vsel %vm255, %v437, %v439
    %v443 = vsel %vm255, %v439, -1e+30
    %v444 = vmax.f32 %v434, %v440
    %v445 = vmax.f32 %v435, %v443
    %v446 = vrot.slane %v260, 4
    %v447 = vrot.slane %v261, 4
    %v452 = vrot.slane %v444, 4
    %v453 = vrot.slane %v445, 4
    %vm456 = vcmask 1043456
    %v457 = vsel %vm456, %v125, %v446
    %v458 = vsel %vm456, %v126, %v447
    %v459 = vsel %vm456, %v352, %v452
    %v460 = vsel %vm456, %v353, %v453
    %v461 = vld [vmem:[%s3] sm:$0xff]
    %v462 = vld [vmem:[%s4] sm:$0xff]
    %464 = vset.pattern.permute.xlu0 0
    %465 = vperm.xlu0 %464, %v462
    %v466 = vpop.permute.xlu0 %465
    %v469 = vsel %vm222, %v461, 0
    %471 = vmatprep.subr.mxu0 %v458
    %472 = vmatpush1.msra.mxu0 %v457
    %473 = vmatprep.subr.mxu0 %v460
    %474 = vmatpush1.msra.mxu0 %v459
    %475 = vmatprep.subr.mxu0 0.0
    %476 = vmatpush1.msra.mxu0 0.0
    %477 = vmatprep.subr.mxu0 0.0
    %478 = vmatpush1.msra.mxu0 0.0
    %479 = vmatprep.subr.mxu0 0.0
    %480 = vmatpush1.msra.mxu0 0.0
    %481 = vmatprep.subr.mxu0 0.0
    %482 = vmatpush1.msra.mxu0 0.0
    %483 = vmatprep.subr.mxu0 0.0
    %484 = vmatpush1.msra.mxu0 0.0
    %485 = vmatprep.subr.mxu0 0.0
    %486 = vmatpush1.msra.mxu0 0.0
    %487 = vmatprep.subr.mxu0 0.0
    %488 = vmatpush1.msra.mxu0 0.0
    %489 = vmatprep.subr.mxu0 0.0
    %490 = vmatpush1.msra.mxu0 0.0
    %491 = vmatprep.subr.mxu0 0.0
    %492 = vmatpush1.msra.mxu0 0.0
    %493 = vmatprep.subr.mxu0 0.0
    %494 = vmatpush1.msra.mxu0 0.0
    %495 = vmatprep.subr.mxu0 0.0
    %496 = vmatpush1.msra.mxu0 0.0
    %497 = vmatprep.subr.mxu0 0.0
    %498 = vmatpush1.msra.mxu0 0.0
    %499 = vmatprep.subr.mxu0 0.0
    %500 = vmatpush1.msra.mxu0 0.0
    %501 = vmatprep.subr.mxu0 0.0
    %502 = vmatpush1.msra.mxu0 0.0
    %503 = vmatprep.subr.mxu0 0.0
    %504 = vmatpush1.msra.mxu0 0.0
    %505 = vmatprep.subr.mxu0 0.0
    %506 = vmatpush1.msra.mxu0 0.0
    %507 = vmatprep.subr.mxu0 0.0
    %508 = vmatpush1.msra.mxu0 0.0
    %509 = vmatprep.subr.mxu0 0.0
    %510 = vmatpush1.msra.mxu0 0.0
    %511 = vmatprep.subr.mxu0 0.0
    %512 = vmatpush1.msra.mxu0 0.0
    %513 = vmatprep.subr.mxu0 0.0
    %514 = vmatpush1.msra.mxu0 0.0
    %515 = vmatprep.subr.mxu0 0.0
    %516 = vmatpush1.msra.mxu0 0.0
    %517 = vmatprep.subr.mxu0 0.0
    %518 = vmatpush1.msra.mxu0 0.0
    %519 = vmatprep.subr.mxu0 0.0
    %520 = vmatpush1.msra.mxu0 0.0
    %521 = vmatprep.subr.mxu0 0.0
    %522 = vmatpush1.msra.mxu0 0.0
    %523 = vmatprep.subr.mxu0 0.0
    %524 = vmatpush1.msra.mxu0 0.0
    %525 = vmatprep.subr.mxu0 0.0
    %526 = vmatpush1.msra.mxu0 0.0
    %527 = vmatprep.subr.mxu0 0.0
    %528 = vmatpush1.msra.mxu0 0.0
    %529 = vmatprep.subr.mxu0 0.0
    %530 = vmatpush1.msra.mxu0 0.0
    %531 = vmatprep.subr.mxu0 0.0
    %532 = vmatpush1.msra.mxu0 0.0
    %533 = vmatprep.subr.mxu0 0.0
    %534 = vmatpush1.msra.mxu0 0.0
    %535 = vmatprep.mubr.f32.mxu0 0.0
    %536 = vmatmul.mubr.f32.gmra.mrb[0].mxu0 %v469
    %v537 = vpop.f32.mrb[0].mxu0
    %v538 = vadd.f32 %v466, %v537
    %v539 = vpop.f32.mrb[0].mxu0
    %v540 = vadd.f32 %v466, %v539
    %541 = vdwg.mxu0
    %v542 = vmul.f32 %v538, 0.5
    %v543 = vmul.f32 %v540, 0.5
    %v544 = vtanh.pop %v542
    %v545 = vtanh.pop %v543
    %v546 = vmul.f32 %v544, 0.5
    %v547 = vmul.f32 %v545, 0.5
    %v548 = vadd.f32 %v546, 0.5
    %v549 = vadd.f32 %v547, 0.5
    %v550 = vmul.f32 %v538, %v548
    %v551 = vmul.f32 %v540, %v549
    %552 = vst [vmem:[#allocation5] sm:$0xff] %v550
    %553 = vst [vmem:[#allocation5 + $0x8] sm:$0xff] %v551
    // Predicated region
    $region26: #{tpu_custom_call.1} parent=1 // pred_check
      _
    $region27: #{tpu_custom_call.1} parent=1 // pred_check_branch
      %555 = sbr.rel (0) target = $region29
    $region28: #{tpu_custom_call.1} parent=1 // pred_region
      %s557 = ssub.s32 256, 256
      %558 = vsyncadd [#allocation4], %s557
      %s560 = sshll.u32 [#allocation5], 4
      %s561 = int_to_ptr.vmem [resolvable:$true] %s560
      %563 = dma.vmem_to_hbm [thread:$0]  %s561, 256, %s5, [#allocation4]
    $region29: #{tpu_custom_call.1} parent=1 // pred_fallthru
      _
    // Predicated region
    $region30: #{tpu_custom_call.1} parent=1 // pred_check
      _
    $region31: #{tpu_custom_call.1} parent=1 // pred_check_branch
      %565 = sbr.rel (0) target = $region33
    $region32: #{tpu_custom_call.1} parent=1 // pred_region
      %566 = dma.done [#allocation4], 256
    $region33: #{tpu_custom_call.1} parent=1 // pred_fallthru
      _
    %567 = vsyncpa [#allocation3], 1
    %568 = vsyncpa [#allocation4], 1

</llo_original>
